<compile_context>
chip_gen: v7x
topology: tpu7x:2x2x1
jax: 0.10.0
libtpu: 0.0.40
codegen_flags: <defaults>
</compile_context>

<pallas_src>
import jax
import jax.numpy as jnp
from jax.experimental import pallas as pl
from jax.experimental.pallas import tpu as pltpu


def _linear_bank_selector_kernel(x_ref, cum_ref, w_ref, b_ref,
                                 probs_ref, newcum_ref):
    # Single fused linear: logits = x @ W_t + b (bf16 operands, f32 MXU accumulation).
    logits = jnp.dot(x_ref[...].astype(w_ref.dtype), w_ref[...],
                     preferred_element_type=jnp.float32)
    logits = logits + b_ref[...]

    # Dense select_logits: selection mask is all-True -> plain softmax over the bank axis.
    m = jnp.max(logits, axis=-1, keepdims=True)
    e = jnp.exp(logits - m)
    denom = jnp.sum(e, axis=-1, keepdims=True)
    # EUP vrcp (free slot alongside exp) + one Newton refinement for f32 accuracy.
    r = pl.reciprocal(denom, approx=True)
    r = r * (2.0 - denom * r)
    probs = e * r

    probs_ref[...] = probs.astype(probs_ref.dtype)
    # statistics = state + probabilities  (cumulative probability mass accumulator)
    newcum_ref[...] = cum_ref[...] + probs.astype(newcum_ref.dtype)


def linear_bank_selector_forward(embedding, state, w_t, b, *, block_b=None):
    """
    embedding: (B, d_model)     f32
    state:     (B, bank_size)   f32 cumulative probability mass (create_state output)
    w_t:       (d_model, bank)  projector weight, pre-transposed (bf16 recommended)
    b:         (1, bank)        projector bias (f32)

    Returns (selection, new_state) mirroring LinearBankSelector.forward:
      selection = (index=None, probabilities, dense_mode=True)   # SelectionSpec equivalent
      new_state = state + probabilities
    """
    B, d_model = embedding.shape
    bank = w_t.shape[1]

    if block_b is None:
        # Biggest batch tile that fits comfortably; fall back to full extent if B is ragged.
        block_b = B if (B <= 512 or B % 8 != 0) else 512
        while B % block_b != 0:
            block_b //= 2
    grid = (B // block_b,)

    row_spec_x = pl.BlockSpec((block_b, d_model), lambda i: (i, 0))
    row_spec_bank = pl.BlockSpec((block_b, bank), lambda i: (i, 0))
    weight_spec = pl.BlockSpec((d_model, bank), lambda i: (0, 0))   # grid-invariant
    bias_spec = pl.BlockSpec((1, bank), lambda i: (0, 0))           # grid-invariant

    probs, new_state = pl.pallas_call(
        _linear_bank_selector_kernel,
        out_shape=(
            jax.ShapeDtypeStruct((B, bank), jnp.float32),
            jax.ShapeDtypeStruct((B, bank), jnp.float32),
        ),
        grid_spec=pltpu.PrefetchScalarGridSpec(
            num_scalar_prefetch=0,
            grid=grid,
            in_specs=[row_spec_x, row_spec_bank, weight_spec, bias_spec],
            out_specs=(row_spec_bank, row_spec_bank),
        ),
        # cumulative state (input 1) aliases the new cumulative output (output 1):
        # no fresh HBM allocation, and the caller can donate the carried state buffer.
        input_output_aliases={1: 1},
        compiler_params=pltpu.CompilerParams(
            dimension_semantics=("parallel",)),
    )(embedding, state, w_t, b)

    # SelectionSpec equivalent for dense mode: (index=None, probabilities, dense_mode=True)
    selection = (None, probs, True)
    return selection, new_state


def create_state(batch_shape, bank_size, dtype=jnp.float32):
    """Mirrors LinearBankSelector.create_state: zero cumulative-probability accumulator."""
    return jnp.zeros((*batch_shape, bank_size), dtype=dtype)


def _reference(embedding, state, w_t_f32, b):
    logits = embedding @ w_t_f32 + b
    probs = jax.nn.softmax(logits, axis=-1)
    return probs, state + probs


if __name__ == "__main__":
    # TODO(synk): sparse selection paths (top_k / top_p / rand -> topk/sort/scatter masks) and
    # control_dropout are not implemented; this covers the default dense configuration.
    B, D_MODEL, BANK = 16, 32, 128

    key = jax.random.PRNGKey(0)
    k1, k2, k3 = jax.random.split(key, 3)

    lim = 1.0 / jnp.sqrt(D_MODEL)
    w_t = jax.random.uniform(k1, (D_MODEL, BANK), jnp.float32, -lim, lim)  # projector weight^T
    b = jax.random.uniform(k2, (1, BANK), jnp.float32, -lim, lim)          # projector bias
    x = jax.random.normal(k3, (B, D_MODEL), jnp.float32)                   # embedding
    state = create_state((B,), BANK)                                       # cumulative mass

    # Weights stored bf16 for the MXU (accumulation stays f32 inside the kernel).
    w_t_bf16 = w_t.astype(jnp.bfloat16)

    (sel_index, probs, dense_mode), new_state = linear_bank_selector_forward(
        x, state, w_t_bf16, b, block_b=8)  # block_b=8 -> grid=(2,) exercises batch tiling
    jax.block_until_ready((probs, new_state))

    ref_probs, ref_state = _reference(x, state, w_t, b)
    assert sel_index is None and dense_mode is True
    assert jnp.allclose(probs, ref_probs, atol=2e-3, rtol=2e-2), "probs mismatch"
    assert jnp.allclose(new_state, ref_state, atol=2e-3, rtol=2e-2), "cumulative mismatch"
    assert jnp.allclose(jnp.sum(probs, axis=-1), 1.0, atol=1e-3), "softmax not normalized"

    print("KERNEL_OK")
</pallas_src>

<mosaic_0001>
module attributes {stable_mosaic.version = 11 : i64} {
  func.func @_linear_bank_selector_kernel(%arg0: i32, %arg1: memref<8x32xf32, #tpu.memory_space<vmem>>, %arg2: memref<8x128xf32, #tpu.memory_space<vmem>>, %arg3: memref<32x128xbf16, #tpu.memory_space<vmem>>, %arg4: memref<1x128xf32, #tpu.memory_space<vmem>>, %arg5: memref<8x128xf32, #tpu.memory_space<vmem>>, %arg6: memref<8x128xf32, #tpu.memory_space<vmem>>) attributes {dimension_semantics = [#tpu.dimension_semantics<parallel>], iteration_bounds = array<i64: 2>, scalar_prefetch = 0 : i64, scratch_operands = 0 : i64, tpu.core_type = #tpu.core_type<tc>, window_params = [{transform_indices = @transform_0, window_bounds = array<i64: 8, 32>}, {transform_indices = @transform_1, window_bounds = array<i64: 8, 128>}, {pipeline_mode = #tpu.pipeline_mode<synchronous>, transform_indices = @transform_2, window_bounds = array<i64: 32, 128>}, {pipeline_mode = #tpu.pipeline_mode<synchronous>, transform_indices = @transform_3, window_bounds = array<i64: 1, 128>}, {transform_indices = @transform_4, window_bounds = array<i64: 8, 128>}, {transform_indices = @transform_5, window_bounds = array<i64: 8, 128>}]} {
    %c0 = arith.constant 0 : index
    %c0_0 = arith.constant 0 : index
    %0 = vector.load %arg1[%c0, %c0_0] : memref<8x32xf32, #tpu.memory_space<vmem>>, vector<8x32xf32>
    %1 = arith.truncf %0 : vector<8x32xf32> to vector<8x32xbf16>
    %c0_1 = arith.constant 0 : index
    %c0_2 = arith.constant 0 : index
    %2 = vector.load %arg3[%c0_1, %c0_2] : memref<32x128xbf16, #tpu.memory_space<vmem>>, vector<32x128xbf16>
    %cst = arith.constant dense<0.000000e+00> : vector<8x128xf32>
    %3 = tpu.matmul %1, %2, %cst {dimension_numbers = #tpu.dot_dimension_numbers<[1], [0], [0], [1], [0, 0, 1, 1], [], []>} : vector<8x32xbf16>, vector<32x128xbf16>, vector<8x128xf32> -> vector<8x128xf32>
    %c0_3 = arith.constant 0 : index
    %c0_4 = arith.constant 0 : index
    %4 = vector.load %arg4[%c0_3, %c0_4] : memref<1x128xf32, #tpu.memory_space<vmem>>, vector<1x128xf32>
    %5 = vector.broadcast %4 : vector<1x128xf32> to vector<8x128xf32>
    %6 = arith.addf %3, %5 : vector<8x128xf32>
    %cst_5 = arith.constant dense<0xFF800000> : vector<8xf32>
    %7 = vector.multi_reduction <maximumf>, %6, %cst_5 [1] : vector<8x128xf32> to vector<8xf32>
    %8 = vector.shape_cast %7 : vector<8xf32> to vector<8x1xf32>
    %9 = vector.broadcast %8 : vector<8x1xf32> to vector<8x128xf32>
    %10 = arith.subf %6, %9 : vector<8x128xf32>
    %11 = math.exp %10 : vector<8x128xf32>
    %cst_6 = arith.constant dense<0.000000e+00> : vector<8xf32>
    %12 = vector.multi_reduction <add>, %11, %cst_6 [1] : vector<8x128xf32> to vector<8xf32>
    %13 = vector.shape_cast %12 : vector<8xf32> to vector<8x1xf32>
    %14 = tpu.reciprocal %13 {approx = true} : vector<8x1xf32> -> vector<8x1xf32>
    %15 = arith.mulf %13, %14 : vector<8x1xf32>
    %cst_7 = arith.constant 2.000000e+00 : f32
    %16 = vector.broadcast %cst_7 : f32 to vector<8x1xf32>
    %17 = arith.subf %16, %15 : vector<8x1xf32>
    %18 = arith.mulf %14, %17 : vector<8x1xf32>
    %19 = vector.broadcast %18 : vector<8x1xf32> to vector<8x128xf32>
    %20 = arith.mulf %11, %19 : vector<8x128xf32>
    %c0_8 = arith.constant 0 : index
    %c0_9 = arith.constant 0 : index
    %21 = vector.load %arg5[%c0_8, %c0_9] : memref<8x128xf32, #tpu.memory_space<vmem>>, vector<8x128xf32>
    tpu.vector_store %arg5[%c0_8, %c0_9], %20 {strides = array<i32>} : memref<8x128xf32, #tpu.memory_space<vmem>>, vector<8x128xf32>,
    %c0_10 = arith.constant 0 : index
    %c0_11 = arith.constant 0 : index
    %22 = vector.load %arg2[%c0_10, %c0_11] : memref<8x128xf32, #tpu.memory_space<vmem>>, vector<8x128xf32>
    %23 = arith.addf %22, %20 : vector<8x128xf32>
    %c0_12 = arith.constant 0 : index
    %c0_13 = arith.constant 0 : index
    %24 = vector.load %arg6[%c0_12, %c0_13] : memref<8x128xf32, #tpu.memory_space<vmem>>, vector<8x128xf32>
    tpu.vector_store %arg6[%c0_12, %c0_13], %23 {strides = array<i32>} : memref<8x128xf32, #tpu.memory_space<vmem>>, vector<8x128xf32>,
    return
  }
  func.func @transform_0(%arg0: i32) -> (i32, i32) {
    %c0_i32 = arith.constant 0 : i32
    %c0_i32_0 = arith.constant 0 : i32
    return %arg0, %c0_i32 : i32, i32
  }
  func.func @transform_1(%arg0: i32) -> (i32, i32) {
    %c0_i32 = arith.constant 0 : i32
    %c0_i32_0 = arith.constant 0 : i32
    return %arg0, %c0_i32 : i32, i32
  }
  func.func @transform_2(%arg0: i32) -> (i32, i32) {
    %c0_i32 = arith.constant 0 : i32
    %c0_i32_0 = arith.constant 0 : i32
    %c0_i32_1 = arith.constant 0 : i32
    return %c0_i32, %c0_i32_0 : i32, i32
  }
  func.func @transform_3(%arg0: i32) -> (i32, i32) {
    %c0_i32 = arith.constant 0 : i32
    %c0_i32_0 = arith.constant 0 : i32
    %c0_i32_1 = arith.constant 0 : i32
    return %c0_i32, %c0_i32_0 : i32, i32
  }
  func.func @transform_4(%arg0: i32) -> (i32, i32) {
    %c0_i32 = arith.constant 0 : i32
    %c0_i32_0 = arith.constant 0 : i32
    return %arg0, %c0_i32 : i32, i32
  }
  func.func @transform_5(%arg0: i32) -> (i32, i32) {
    %c0_i32 = arith.constant 0 : i32
    %c0_i32_0 = arith.constant 0 : i32
    return %arg0, %c0_i32 : i32, i32
  }
}

</mosaic_0001>

<llo_original>
// kernel: tpu_custom_call.1
$region0: #{tpu_custom_call.1}
  #allocation0 [shape = 'u32[]', space=smem, size = 0x4, offset = 0x4, fixed_abs, tag = 'smem constant byte address 0x4 - core index']
  #allocation1 [shape = 'u32[144,128]{1,0:T(1,128)}', space=vmem, size = 0x12000, scoped, tag = 'internal scratch']
  %s0 = inlined_call_operand.vmem [shape: f32[16,32], index: 0, kind: input, shape index: {}]
  %s1 = inlined_call_operand.hbm [shape: f32[16,128], index: 1, kind: input, shape index: {}, may-alias: {1,5}]
  %s2 = inlined_call_operand.vmem [shape: bf16[32,128], index: 2, kind: input, shape index: {}]
  %s3 = inlined_call_operand.hbm [shape: f32[1,128], index: 3, kind: input, shape index: {}]
  %s4 = inlined_call_operand.hbm [shape: f32[16,128], index: 4, kind: output, shape index: {0}]
  %s5 = inlined_call_operand.hbm [shape: f32[16,128], index: 5, kind: output, shape index: {1}, may-alias: {1,5}]
  %6 = xla_tuple %s4, %s5
  %s7 = sld [smem:[#allocation0]]
  $region65: #{tpu_custom_call.1} parent=0
    _
  %s9 = ssub.s32 1, %s7
  %s10 = scalar_select 0, %s9, %s7
  $region1: #{tpu_custom_call.1} parent=0
    #allocation2 [shape = 'u8[8192]{0}', space=vmem, size = 0x2000, scoped, tag = 'input window, operand 1']
    #allocation3 [shape = 's32[2]{0}', space=sflag, size = 0x8, scoped, tag = 'scoped memory for tpu_custom_call.1']
    #allocation4 [shape = 's32[2]{0}', space=sflag, size = 0x8, scoped, tag = 'scoped memory for tpu_custom_call.1']
    #allocation5 [shape = 'u8[512]{0}', space=vmem, size = 0x400, scoped, tag = 'input window, operand 3, single buffered']
    #allocation6 [shape = 's32[1]{0}', space=sflag, size = 0x4, scoped, tag = 'scoped memory for tpu_custom_call.1']
    #allocation7 [shape = 'u8[8192]{0}', space=vmem, size = 0x2000, scoped, tag = 'output window, operand 0']
    #allocation8 [shape = 'u8[8192]{0}', space=vmem, size = 0x2000, scoped, tag = 'output window, operand 1']
    #allocation9 [shape = 's32[2]{0}', space=sflag, size = 0x8, scoped, tag = 'scoped memory for tpu_custom_call.1']
    %11 = vsyncpa [#allocation3], 0
    %s12 = scalar_lea.sflag [#allocation3], 1
    %13 = vsyncpa %s12, 0
    %14 = vsyncpa [#allocation6], 0
    %15 = vsyncpa [#allocation4], 0
    %s16 = scalar_lea.sflag [#allocation4], 1
    %17 = vsyncpa %s16, 0
    %18 = vsyncpa [#allocation9], 0
    %s19 = scalar_lea.sflag [#allocation9], 1
    %20 = vsyncpa %s19, 0
    loop: start=0, step=1, limit=4
    $region2: #{tpu_custom_call.1} parent=1 // loop_pre_header
      _
    $region3: #{tpu_custom_call.1} parent=1 // loop_header
      %s22 = sphi 0, %s26
      %p23 = scmp.ge.s32.totalorder %s22, 4
      %s32 = sphi 0, %s34
      %s35 = sphi 0, %s32
      %s36 = sphi 0, %s35
      %s52 = sphi 0, %s36
      %s58 = sphi 0, %s60
      %s61 = sphi 0, %s58
      %s62 = sphi 0, %s61
      %s78 = sphi 0, %s62
      %s82 = sphi 0, %s82
      %s84 = sphi 0, %s82
      %s85 = sphi 0, %s84
      %s99 = sphi 0, %s85
      %s103 = sphi 0, %s103
      %s105 = sphi 0, %s103
      %s106 = sphi 0, %s105
      %s120 = sphi 0, %s106
      %s126 = sphi 0, %s128
      %s129 = sphi 0, %s126
      %s130 = sphi 0, %s129
      %s146 = sphi 0, %s130
      %s152 = sphi 0, %s154
      %s155 = sphi 0, %s152
      %s156 = sphi 0, %s155
      %s172 = sphi 0, %s156
    $region4: #{tpu_custom_call.1} parent=1 // loop_header_branch
      %25 = sbr.rel (%p23) target = $region8
    $region5: #{tpu_custom_call.1} parent=1 // loop_body
      %s27 = ssub.s32 %s22, 1
      %s28 = ssub.s32 %s22, 2
      %s29 = sadd.s32 %s22, 1
      %s30 = ssub.s32 %s22, %s29
      %p31 = scmp.eq.s32.totalorder %s30, 0
      %s33 = sadd.s32 %s32, 1
      %s34 = scalar_select %p31, %s32, %s33
      %p37 = pneg %p31
      %p38 = scmp.eq.s32.totalorder %s22, 1
      %p39 = por %p37, %p38
      %p40 = scmp.ne.s32.totalorder %s32, %s35
      %p41 = scmp.eq.s32.totalorder %s22, 0
      %p42 = por %p40, %p41
      %p43 = scmp.ne.s32.totalorder %s32, %s35
      %p44 = scmp.eq.s32.totalorder %s27, 1
      %p45 = por %p43, %p44
      %p46 = scmp.ne.s32.totalorder %s35, %s36
      %p47 = scmp.eq.s32.totalorder %s27, 0
      %p48 = por %p46, %p47
      %p49 = scmp.ne.s32.totalorder %s35, %s36
      %p50 = scmp.eq.s32.totalorder %s28, 1
      %p51 = por %p49, %p50
      %p53 = scmp.ne.s32.totalorder %s36, %s52
      %p54 = scmp.eq.s32.totalorder %s28, 0
      %p55 = por %p53, %p54
      %s56 = ssub.s32 %s22, %s29
      %p57 = scmp.eq.s32.totalorder %s56, 0
      %s59 = sadd.s32 %s58, 1
      %s60 = scalar_select %p57, %s58, %s59
      %p63 = pneg %p57
      %p64 = scmp.eq.s32.totalorder %s22, 1
      %p65 = por %p63, %p64
      %p66 = scmp.ne.s32.totalorder %s58, %s61
      %p67 = scmp.eq.s32.totalorder %s22, 0
      %p68 = por %p66, %p67
      %p69 = scmp.ne.s32.totalorder %s58, %s61
      %p70 = scmp.eq.s32.totalorder %s27, 1
      %p71 = por %p69, %p70
      %p72 = scmp.ne.s32.totalorder %s61, %s62
      %p73 = scmp.eq.s32.totalorder %s27, 0
      %p74 = por %p72, %p73
      %p75 = scmp.ne.s32.totalorder %s61, %s62
      %p76 = scmp.eq.s32.totalorder %s28, 1
      %p77 = por %p75, %p76
      %p79 = scmp.ne.s32.totalorder %s62, %s78
      %p80 = scmp.eq.s32.totalorder %s28, 0
      %p81 = por %p79, %p80
      %s83 = sadd.s32 %s82, 1
      %p86 = scmp.eq.s32.totalorder %s22, 1
      %p87 = scmp.ne.s32.totalorder %s82, %s84
      %p88 = scmp.eq.s32.totalorder %s22, 0
      %p89 = por %p87, %p88
      %p90 = scmp.ne.s32.totalorder %s82, %s84
      %p91 = scmp.eq.s32.totalorder %s27, 1
      %p92 = por %p90, %p91
      %p93 = scmp.ne.s32.totalorder %s84, %s85
      %p94 = scmp.eq.s32.totalorder %s27, 0
      %p95 = por %p93, %p94
      %p96 = scmp.ne.s32.totalorder %s84, %s85
      %p97 = scmp.eq.s32.totalorder %s28, 1
      %p98 = por %p96, %p97
      %p100 = scmp.ne.s32.totalorder %s85, %s99
      %p101 = scmp.eq.s32.totalorder %s28, 0
      %p102 = por %p100, %p101
      %s104 = sadd.s32 %s103, 1
      %p107 = scmp.eq.s32.totalorder %s22, 1
      %p108 = scmp.ne.s32.totalorder %s103, %s105
      %p109 = scmp.eq.s32.totalorder %s22, 0
      %p110 = por %p108, %p109
      %p111 = scmp.ne.s32.totalorder %s103, %s105
      %p112 = scmp.eq.s32.totalorder %s27, 1
      %p113 = por %p111, %p112
      %p114 = scmp.ne.s32.totalorder %s105, %s106
      %p115 = scmp.eq.s32.totalorder %s27, 0
      %p116 = por %p114, %p115
      %p117 = scmp.ne.s32.totalorder %s105, %s106
      %p118 = scmp.eq.s32.totalorder %s28, 1
      %p119 = por %p117, %p118
      %p121 = scmp.ne.s32.totalorder %s106, %s120
      %p122 = scmp.eq.s32.totalorder %s28, 0
      %p123 = por %p121, %p122
      %s124 = ssub.s32 %s22, %s29
      %p125 = scmp.eq.s32.totalorder %s124, 0
      %s127 = sadd.s32 %s126, 1
      %s128 = scalar_select %p125, %s126, %s127
      %p131 = pneg %p125
      %p132 = scmp.eq.s32.totalorder %s22, 1
      %p133 = por %p131, %p132
      %p134 = scmp.ne.s32.totalorder %s126, %s129
      %p135 = scmp.eq.s32.totalorder %s22, 0
      %p136 = por %p134, %p135
      %p137 = scmp.ne.s32.totalorder %s126, %s129
      %p138 = scmp.eq.s32.totalorder %s27, 1
      %p139 = por %p137, %p138
      %p140 = scmp.ne.s32.totalorder %s129, %s130
      %p141 = scmp.eq.s32.totalorder %s27, 0
      %p142 = por %p140, %p141
      %p143 = scmp.ne.s32.totalorder %s129, %s130
      %p144 = scmp.eq.s32.totalorder %s28, 1
      %p145 = por %p143, %p144
      %p147 = scmp.ne.s32.totalorder %s130, %s146
      %p148 = scmp.eq.s32.totalorder %s28, 0
      %p149 = por %p147, %p148
      %s150 = ssub.s32 %s22, %s29
      %p151 = scmp.eq.s32.totalorder %s150, 0
      %s153 = sadd.s32 %s152, 1
      %s154 = scalar_select %p151, %s152, %s153
      %p157 = pneg %p151
      %p158 = scmp.eq.s32.totalorder %s22, 1
      %p159 = por %p157, %p158
      %p160 = scmp.ne.s32.totalorder %s152, %s155
      %p161 = scmp.eq.s32.totalorder %s22, 0
      %p162 = por %p160, %p161
      %p163 = scmp.ne.s32.totalorder %s152, %s155
      %p164 = scmp.eq.s32.totalorder %s27, 1
      %p165 = por %p163, %p164
      %p166 = scmp.ne.s32.totalorder %s155, %s156
      %p167 = scmp.eq.s32.totalorder %s27, 0
      %p168 = por %p166, %p167
      %p169 = scmp.ne.s32.totalorder %s155, %s156
      %p170 = scmp.eq.s32.totalorder %s28, 1
      %p171 = por %p169, %p170
      %p173 = scmp.ne.s32.totalorder %s156, %s172
      %p174 = scmp.eq.s32.totalorder %s28, 0
      %p175 = por %p173, %p174
      %p176 = scmp.le.s32.totalorder 1, %s22
      %p177 = scmp.lt.s32.totalorder %s22, 3
      %p178 = pnand %p176, %p177
      %p179 = pneg %p178
      // Predicated region
      $region9: #{tpu_custom_call.1} parent=5 // pred_check
        _
      $region10: #{tpu_custom_call.1} parent=5 // pred_check_branch
        %181 = sbr.rel (%p178) target = $region12
      $region11: #{tpu_custom_call.1} parent=5 // pred_region
        %s182 = ssub.s32 %s22, 1
        // Predicated region
        $region13: #{tpu_custom_call.1} parent=11 // pred_check
          %p183 = pneg %p95
        $region14: #{tpu_custom_call.1} parent=11 // pred_check_branch
          %185 = sbr.rel (%p183) target = $region16
        $region15: #{tpu_custom_call.1} parent=11 // pred_region
          _
        $region16: #{tpu_custom_call.1} parent=11 // pred_fallthru
          _
        // Predicated region
        $region17: #{tpu_custom_call.1} parent=11 // pred_check
          %p186 = pneg %p116
        $region18: #{tpu_custom_call.1} parent=11 // pred_check_branch
          %188 = sbr.rel (%p186) target = $region20
        $region19: #{tpu_custom_call.1} parent=11 // pred_region
          %s190 = ssub.s32 16, 16
          %191 = vsyncadd [#allocation6], %s190
          %s193 = sshll.u32 [#allocation5], 4
          %s194 = int_to_ptr.vmem [resolvable:$true] %s193
          %196 = dma.hbm_to_vmem [thread:$0]  %s3, 16, %s194, [#allocation6]
        $region20: #{tpu_custom_call.1} parent=11 // pred_fallthru
          _
      $region12: #{tpu_custom_call.1} parent=5 // pred_fallthru
        _
      %p197 = scmp.lt.s32.totalorder %s22, 2
      // Predicated region
      $region21: #{tpu_custom_call.1} parent=5 // pred_check
        %p198 = pneg %p197
      $region22: #{tpu_custom_call.1} parent=5 // pred_check_branch
        %200 = sbr.rel (%p198) target = $region24
      $region23: #{tpu_custom_call.1} parent=5 // pred_region
        // Predicated region
        $region25: #{tpu_custom_call.1} parent=23 // pred_check
          %p201 = pneg %p42
        $region26: #{tpu_custom_call.1} parent=23 // pred_check_branch
          %203 = sbr.rel (%p201) target = $region28
        $region27: #{tpu_custom_call.1} parent=23 // pred_region
          %p204 = scmp.lt.s32.totalorder %s22, 1
          %s205 = scalar_select %p204, %s22, 1
          %s206 = smul.addr %s205, 8
          %s207 = scalar_lea.vmem %s0, %s206
        $region28: #{tpu_custom_call.1} parent=23 // pred_fallthru
          _
        // Predicated region
        $region29: #{tpu_custom_call.1} parent=23 // pred_check
          %p208 = pneg %p68
        $region30: #{tpu_custom_call.1} parent=23 // pred_check_branch
          %210 = sbr.rel (%p208) target = $region32
        $region31: #{tpu_custom_call.1} parent=23 // pred_region
          %s211 = sand.u32 %s58, 1
          %s212 = scalar_lea.sflag [#allocation3], %s211
          %s213 = sand.u32 %s58, 1
          %s214 = smul.addr %s213, 8
          %s215 = scalar_lea.vmem [#allocation2], %s214
          %s217 = ssub.s32 128, 128
          %218 = vsyncadd %s212, %s217
          %s219 = smul.addr %s22, 128
          %s220 = scalar_lea.hbm %s1, %s219
          %s222 = sshll.u32 %s215, 4
          %s223 = int_to_ptr.vmem [resolvable:$true] %s222
          %225 = dma.hbm_to_vmem [thread:$0]  %s220, 128, %s223, %s212
        $region32: #{tpu_custom_call.1} parent=23 // pred_fallthru
          _
      $region24: #{tpu_custom_call.1} parent=5 // pred_fallthru
        _
      %p226 = scmp.le.s32.totalorder 1, %s22
      %p227 = scmp.lt.s32.totalorder %s22, 3
      %p228 = pnand %p226, %p227
      %p229 = pneg %p228
      // Predicated region
      $region33: #{tpu_custom_call.1} parent=5 // pred_check
        _
      $region34: #{tpu_custom_call.1} parent=5 // pred_check_branch
        %231 = sbr.rel (%p228) target = $region36
      $region35: #{tpu_custom_call.1} parent=5 // pred_region
        %s232 = ssub.s32 %s22, 1
        %s233 = sand.u32 %s61, 1
        %s234 = scalar_lea.sflag [#allocation3], %s233
        %s235 = sand.u32 %s61, 1
        %s236 = smul.addr %s235, 8
        %s237 = scalar_lea.vmem [#allocation2], %s236
        // Predicated region
        $region37: #{tpu_custom_call.1} parent=35 // pred_check
          %p238 = pneg %p74
        $region38: #{tpu_custom_call.1} parent=35 // pred_check_branch
          %240 = sbr.rel (%p238) target = $region40
        $region39: #{tpu_custom_call.1} parent=35 // pred_region
          %241 = dma.done %s234, 128
        $region40: #{tpu_custom_call.1} parent=35 // pred_fallthru
          _
        // Predicated region
        $region41: #{tpu_custom_call.1} parent=35 // pred_check
          %p242 = pneg %p116
        $region42: #{tpu_custom_call.1} parent=35 // pred_check_branch
          %244 = sbr.rel (%p242) target = $region44
        $region43: #{tpu_custom_call.1} parent=35 // pred_region
          %245 = dma.done [#allocation6], 16
        $region44: #{tpu_custom_call.1} parent=35 // pred_fallthru
          _
        %p246 = scmp.lt.s32.totalorder %s27, 1
        %s247 = scalar_select %p246, %s27, 1
        %s248 = smul.addr %s247, 8
        %s249 = scalar_lea.vmem %s0, %s248
        %p250 = pneg %p48
        %p251 = pneg %p45
        %s252 = sand.u32 %s61, 1
        %s253 = scalar_lea.sflag [#allocation3], %s252
        %s254 = sand.u32 %s61, 1
        %s255 = smul.addr %s254, 8
        %s256 = scalar_lea.vmem [#allocation2], %s255
        %p257 = pneg %p74
        %p258 = pneg %p71
        %p259 = pneg %p95
        %p260 = pneg %p92
        %p261 = pneg %p116
        %p262 = pneg %p113
        %p263 = pneg %p142
        %p264 = pneg %p139
        %s265 = sand.u32 %s129, 1
        %s266 = scalar_lea.sflag [#allocation4], %s265
        %s267 = sand.u32 %s129, 1
        %s268 = smul.addr %s267, 8
        %s269 = scalar_lea.vmem [#allocation7], %s268
        %p270 = pneg %p168
        %p271 = pneg %p165
        %s272 = sand.u32 %s155, 1
        %s273 = scalar_lea.sflag [#allocation9], %s272
        %s274 = sand.u32 %s155, 1
        %s275 = smul.addr %s274, 8
        %s276 = scalar_lea.vmem [#allocation8], %s275
        %p277 = scmp.lt.s32.totalorder %s27, 1
        %s278 = scalar_select %p277, %s27, 1
        %s279 = smul.addr %s278, 8
        %s280 = scalar_lea.vmem %s0, %s279
        %v282 = vld [vmem:[%s280] sm:$0xff]
        %v283 = vpack.c.bf16 %v282, %v282
        %v284 = vld [vmem:[%s2] sm:$0xf]
        %v285 = vld [vmem:[%s2 + $0x4] sm:$0xf]
        %v286 = vld [vmem:[%s2 + $0x8] sm:$0xf]
        %v287 = vld [vmem:[%s2 + $0xc] sm:$0xf]
        %v288 = vld [vmem:[#allocation5] sm:$0x1]
        %v290 = vlaneseq
        %v291 = vshrl.u32 %v290, 7
        %v292 = vsub.s32 0, %v291
        %v293 = vrot.slane %v288, %v292
        %v299 = vunpack.c.l.b16 %v284
        %v300 = vunpack.c.l.b16 %v285
        %v301 = vunpack.c.l.b16 %v286
        %v302 = vunpack.c.l.b16 %v287
        %v303 = vpack.c.b16 %v300, %v299
        %v304 = vpack.c.b16 %v302, %v301
        %vm307 = vcmask 261120
        %v309 = vsel %vm307, %v283, 0
        %311 = vmatprep.subr.bf16.mxu0 0
        %312 = vmatpush1.bf16.msra.mxu0 %v303
        %313 = vmatprep.subr.bf16.mxu0 0
        %314 = vmatpush1.bf16.msra.mxu0 %v304
        %315 = vmatprep.subr.bf16.mxu0 0
        %316 = vmatpush1.bf16.msra.mxu0 0
        %317 = vmatprep.subr.bf16.mxu0 0
        %318 = vmatpush1.bf16.msra.mxu0 0
        %319 = vmatprep.subr.bf16.mxu0 0
        %320 = vmatpush1.bf16.msra.mxu0 0
        %321 = vmatprep.subr.bf16.mxu0 0
        %322 = vmatpush1.bf16.msra.mxu0 0
        %323 = vmatprep.subr.bf16.mxu0 0
        %324 = vmatpush1.bf16.msra.mxu0 0
        %325 = vmatprep.subr.bf16.mxu0 0
        %326 = vmatpush1.bf16.msra.mxu0 0
        %327 = vmatprep.subr.bf16.mxu0 0
        %328 = vmatpush1.bf16.msra.mxu0 0
        %329 = vmatprep.subr.bf16.mxu0 0
        %330 = vmatpush1.bf16.msra.mxu0 0
        %331 = vmatprep.subr.bf16.mxu0 0
        %332 = vmatpush1.bf16.msra.mxu0 0
        %333 = vmatprep.subr.bf16.mxu0 0
        %334 = vmatpush1.bf16.msra.mxu0 0
        %335 = vmatprep.subr.bf16.mxu0 0
        %336 = vmatpush1.bf16.msra.mxu0 0
        %337 = vmatprep.subr.bf16.mxu0 0
        %338 = vmatpush1.bf16.msra.mxu0 0
        %339 = vmatprep.subr.bf16.mxu0 0
        %340 = vmatpush1.bf16.msra.mxu0 0
        %341 = vmatprep.subr.bf16.mxu0 0
        %342 = vmatpush1.bf16.msra.mxu0 0
        %343 = vmatprep.mubr.bf16.mxu0 0
        %344 = vmatmul.mubr.bf16.gmra.mrb[0].mxu0 %v309
        %v345 = vpop.f32.mrb[0].mxu0
        %v346 = vadd.f32 %v293, %v345
        %v347 = vpop.f32.mrb[0].mxu0
        %v348 = vpop.f32.mrb[0].mxu0
        %v349 = vpop.f32.mrb[0].mxu0
        %350 = vdwg.mxu0
        %351 = vmax.xlane.f32.xlu0 %v346
        %v352 = vpop.xlane.xlu0 %351
        %v353 = vsub.f32 %v346, %v352
        %v354 = vmul.f32 %v353, 1.442695
        %v355 = vpow.pop %v354
        %356 = vadd.xlane.f32.xlu0 %v355
        %v357 = vpop.xlane.xlu0 %356
        %v358 = vrcp.pop %v357
        %v359 = vmul.f32 %v357, %v358
        %v360 = vsub.f32 2.0, %v359
        %v361 = vmul.f32 %v358, %v360
        %v362 = vmul.f32 %v355, %v361
        %363 = vst [vmem:[%s269] sm:$0xff] %v362
        %v364 = vld [vmem:[%s237] sm:$0xff]
        %v365 = vadd.f32 %v364, %v362
        %366 = vst [vmem:[%s276] sm:$0xff] %v365
        %s367 = sand.u32 %s129, 1
        %s368 = scalar_lea.sflag [#allocation4], %s367
        %s369 = sand.u32 %s129, 1
        %s370 = smul.addr %s369, 8
        %s371 = scalar_lea.vmem [#allocation7], %s370
        %s372 = sand.u32 %s155, 1
        %s373 = scalar_lea.sflag [#allocation9], %s372
        %s374 = sand.u32 %s155, 1
        %s375 = smul.addr %s374, 8
        %s376 = scalar_lea.vmem [#allocation8], %s375
        // Predicated region
        $region45: #{tpu_custom_call.1} parent=35 // pred_check
          %p377 = pneg %p139
        $region46: #{tpu_custom_call.1} parent=35 // pred_check_branch
          %379 = sbr.rel (%p377) target = $region48
        $region47: #{tpu_custom_call.1} parent=35 // pred_region
          %s381 = ssub.s32 128, 128
          %382 = vsyncadd %s368, %s381
          %s383 = smul.addr %s27, 128
          %s384 = scalar_lea.hbm %s4, %s383
          %s386 = sshll.u32 %s371, 4
          %s387 = int_to_ptr.vmem [resolvable:$true] %s386
          %389 = dma.vmem_to_hbm [thread:$0]  %s387, 128, %s384, %s368
        $region48: #{tpu_custom_call.1} parent=35 // pred_fallthru
          _
        // Predicated region
        $region49: #{tpu_custom_call.1} parent=35 // pred_check
          %p390 = pneg %p165
        $region50: #{tpu_custom_call.1} parent=35 // pred_check_branch
          %392 = sbr.rel (%p390) target = $region52
        $region51: #{tpu_custom_call.1} parent=35 // pred_region
          %s394 = ssub.s32 128, 128
          %395 = vsyncadd %s373, %s394
          %s396 = smul.addr %s27, 128
          %s397 = scalar_lea.hbm %s5, %s396
          %s399 = sshll.u32 %s376, 4
          %s400 = int_to_ptr.vmem [resolvable:$true] %s399
          %402 = dma.vmem_to_hbm [thread:$0]  %s400, 128, %s397, %s373
        $region52: #{tpu_custom_call.1} parent=35 // pred_fallthru
          _
      $region36: #{tpu_custom_call.1} parent=5 // pred_fallthru
        _
      %p403 = scmp.le.s32.totalorder 2, %s22
      // Predicated region
      $region53: #{tpu_custom_call.1} parent=5 // pred_check
        %p404 = pneg %p403
      $region54: #{tpu_custom_call.1} parent=5 // pred_check_branch
        %406 = sbr.rel (%p404) target = $region56
      $region55: #{tpu_custom_call.1} parent=5 // pred_region
        %s407 = ssub.s32 %s22, 2
        // Predicated region
        $region57: #{tpu_custom_call.1} parent=55 // pred_check
          %p408 = pneg %p145
        $region58: #{tpu_custom_call.1} parent=55 // pred_check_branch
          %410 = sbr.rel (%p408) target = $region60
        $region59: #{tpu_custom_call.1} parent=55 // pred_region
          %s411 = sand.u32 %s130, 1
          %s412 = scalar_lea.sflag [#allocation4], %s411
          %s413 = sand.u32 %s130, 1
          %s414 = smul.addr %s413, 8
          %s415 = scalar_lea.vmem [#allocation7], %s414
          %416 = dma.done %s412, 128
        $region60: #{tpu_custom_call.1} parent=55 // pred_fallthru
          _
        // Predicated region
        $region61: #{tpu_custom_call.1} parent=55 // pred_check
          %p417 = pneg %p171
        $region62: #{tpu_custom_call.1} parent=55 // pred_check_branch
          %419 = sbr.rel (%p417) target = $region64
        $region63: #{tpu_custom_call.1} parent=55 // pred_region
          %s420 = sand.u32 %s156, 1
          %s421 = scalar_lea.sflag [#allocation9], %s420
          %s422 = sand.u32 %s156, 1
          %s423 = smul.addr %s422, 8
          %s424 = scalar_lea.vmem [#allocation8], %s423
          %425 = dma.done %s421, 128
        $region64: #{tpu_custom_call.1} parent=55 // pred_fallthru
          _
      $region56: #{tpu_custom_call.1} parent=5 // pred_fallthru
        _
    $region6: #{tpu_custom_call.1} parent=1 // loop_footer
      %s26 = sadd.s32 1, %s22
    $region7: #{tpu_custom_call.1} parent=1 // loop_footer_branch
      %21 = sbr.rel target = $region3
    $region8: #{tpu_custom_call.1} parent=1 // loop_exit
      _
    %426 = vsyncpa [#allocation3], 1
    %s427 = scalar_lea.sflag [#allocation3], 1
    %428 = vsyncpa %s427, 1
    %429 = vsyncpa [#allocation6], 1
    %430 = vsyncpa [#allocation4], 1
    %s431 = scalar_lea.sflag [#allocation4], 1
    %432 = vsyncpa %s431, 1
    %433 = vsyncpa [#allocation9], 1
    %s434 = scalar_lea.sflag [#allocation9], 1
    %435 = vsyncpa %s434, 1

</llo_original>
